<compile_context>
chip_gen: v5e
topology: v5e:2x2
jax: 0.10.0
libtpu: 0.0.40
codegen_flags: <defaults>
</compile_context>

<pallas_src>
import functools
import math

import jax
import jax.numpy as jnp
from jax.experimental import pallas as pl
from jax.experimental.pallas import tpu as pltpu

_LANE = 128      # feature dims are padded to multiples of this (lane width)
_SUBLANE = 8     # sublane granularity for f32 batch tiles


def _round_up(x, m):
    return ((x + m - 1) // m) * m


def _cdiv(a, b):
    return -(-a // b)


def _pad_to(a, shape):
    """Zero-pad `a` up to `shape` (no-op if already that shape)."""
    pads = [(0, t - s) for s, t in zip(a.shape, shape)]
    if all(p[1] == 0 for p in pads):
        return a
    return jnp.pad(a, pads)


_MEMSPACE = getattr(pltpu, "MemorySpace", None) or getattr(pltpu, "TPUMemorySpace", None)


def _resident_spec(block_shape, index_map):
    """Spec for a grid-invariant operand (fused weights / bias).

    memory_space=VMEM with no block_shape keeps the whole array resident in VMEM
    with a SINGLE buffer (no double-buffering of invariant weights -> half the
    weight VMEM footprint, which matters on v7x's 64 MiB VMEM).  Falls back to a
    constant-index-map blocked spec if the memory-space enum is unavailable.
    """
    if _MEMSPACE is not None:
        return pl.BlockSpec(memory_space=_MEMSPACE.VMEM)
    return pl.BlockSpec(block_shape, index_map)


def _vmem_limit_bytes():
    """Generation-aware VMEM limit: ~75% of physical capacity.

    v5e/v6e (128 MiB) -> 96 MiB (permits larger batch tiles than the 32 MiB scoped
    default); v7x (64 MiB / TC) -> 48 MiB (headroom for compiler scratch and the
    (tb, 2H) f32 pre-activation slab).
    """
    cap = 64 << 20
    try:
        info = pltpu.get_tpu_info()
        cap = getattr(info, "vmem_capacity_bytes", None) or cap
    except Exception:
        pass
    return min(int(cap * 0.75), 112 << 20)


def _pick_batch_tiling(batch, batch_tile):
    """Choose (tb, B_pad): tb multiple of 8, >=2 tiles when batch allows it.

    Two or more tiles let the "parallel" batch axis shard across TensorCores on
    v7x and let input/output DMA overlap compute; on v5e/v6e (1 TC) it is neutral.
    """
    b8 = _round_up(max(batch, _SUBLANE), _SUBLANE)
    tb = min(_round_up(batch_tile, _SUBLANE), b8)
    if b8 >= 2 * _SUBLANE:
        tb = min(tb, _round_up(_cdiv(b8, 2), _SUBLANE))
    b_pad = _round_up(b8, tb)
    return tb, b_pad


# ---------------------------------------------------------------------------
# Kernels
# ---------------------------------------------------------------------------

def _mgu_cell_kernel(x_ref, h_ref, wx_ref, wh_ref, b_ref, out_ref):
    """One batch tile of a single MGU step (fused 2H gate pre-activation)."""
    hp = out_ref.shape[-1]                     # padded hidden size (multiple of 128)

    h_f32 = h_ref[...].astype(jnp.float32)     # f32 copy for the blend

    # bf16 MXU operands, f32 accumulation; bias added on the f32 accumulator.
    pre = jnp.dot(x_ref[...].astype(jnp.bfloat16), wx_ref[...],
                  preferred_element_type=jnp.float32)
    pre = pre + jnp.dot(h_ref[...].astype(jnp.bfloat16), wh_ref[...],
                        preferred_element_type=jnp.float32)
    pre = pre + b_ref[...]                     # (tb, 2*hp)

    # sigmoid via EUP exp + approx reciprocal (frees the VPU divide).
    z = pl.reciprocal(1.0 + jnp.exp(-pre[:, :hp]), approx=True)
    h_tilde = jnp.tanh(pre[:, hp:])

    # (1 - z) * h + z * h_tilde == h + z * (h_tilde - h)
    out_ref[...] = (h_f32 + z * (h_tilde - h_f32)).astype(out_ref.dtype)


def _mgu_seq_kernel(x_ref, h0_ref, wx_ref, wh_ref, b_ref, out_ref, h_carry):
    """One batch tile, one time step; hidden state carried in f32 VMEM scratch."""
    hp = h_carry.shape[-1]
    t = pl.program_id(1)

    @pl.when(t == 0)
    def _():
        h_carry[...] = h0_ref[...].astype(jnp.float32)

    h = h_carry[...]                           # f32 carried state (never hits HBM)

    pre = jnp.dot(x_ref[0].astype(jnp.bfloat16), wx_ref[...],
                  preferred_element_type=jnp.float32)
    pre = pre + jnp.dot(h.astype(jnp.bfloat16), wh_ref[...],
                        preferred_element_type=jnp.float32)
    pre = pre + b_ref[...]

    z = pl.reciprocal(1.0 + jnp.exp(-pre[:, :hp]), approx=True)
    h_tilde = jnp.tanh(pre[:, hp:])

    h_new = h + z * (h_tilde - h)
    h_carry[...] = h_new
    out_ref[0] = h_new.astype(out_ref.dtype)


# ---------------------------------------------------------------------------
# Parameter prep + wrappers
# ---------------------------------------------------------------------------

def prepare_params(params, input_size, *, lane_multiple=_LANE):
    """One-time fusion, transpose and 128-lane padding of the PyTorch-layout params.

    params: {"W_z": (H, I+H), "b_z": (H,), "W_h": (H, I+H), "b_h": (H,)}
    Returns bf16 fused weights and an f32 fused bias, zero-padded so that
    I -> I_pad, H -> H_pad are multiples of `lane_multiple` and the z gate
    occupies columns [0:H_pad), the candidate gate columns [H_pad:2*H_pad).
    Zero padding keeps padded hidden columns exactly zero across steps.
    """
    W_z, b_z = params["W_z"], params["b_z"]
    W_h, b_h = params["W_h"], params["b_h"]
    I = input_size
    H = W_z.shape[0]
    I_pad = _round_up(I, lane_multiple)
    H_pad = _round_up(H, lane_multiple)

    w_x = jnp.zeros((I_pad, 2 * H_pad), jnp.float32)
    w_x = w_x.at[:I, :H].set(W_z[:, :I].T)
    w_x = w_x.at[:I, H_pad:H_pad + H].set(W_h[:, :I].T)

    w_h = jnp.zeros((H_pad, 2 * H_pad), jnp.float32)
    w_h = w_h.at[:H, :H].set(W_z[:, I:].T)
    w_h = w_h.at[:H, H_pad:H_pad + H].set(W_h[:, I:].T)

    b = jnp.zeros((1, 2 * H_pad), jnp.float32)
    b = b.at[0, :H].set(b_z)
    b = b.at[0, H_pad:H_pad + H].set(b_h)

    return {
        "w_x": w_x.astype(jnp.bfloat16),   # (I_pad, 2*H_pad)
        "w_h": w_h.astype(jnp.bfloat16),   # (H_pad, 2*H_pad)
        "b": b,                            # (1, 2*H_pad) f32
    }


@functools.partial(jax.jit, static_argnames=("batch_tile",))
def mgu_cell(x_t, h_prev, prepared, *, batch_tile=512):
    """One MGU time step. x_t: (B, I), h_prev: (B, H) -> h_t: (B, H).

    x_t / h_prev may be f32 or bf16 (kernel casts for the MXU, blends in f32).
    Padding to (B_pad, 128-multiples) is a no-op if the caller keeps activations
    pre-padded; the output is sliced back to (B, H).
    """
    B, _ = x_t.shape
    H = h_prev.shape[1]
    I_pad = prepared["w_x"].shape[0]
    H_pad = prepared["w_h"].shape[0]

    tb, B_pad = _pick_batch_tiling(B, batch_tile)
    x_p = _pad_to(x_t, (B_pad, I_pad))
    h_p = _pad_to(h_prev, (B_pad, H_pad))

    out = pl.pallas_call(
        _mgu_cell_kernel,
        out_shape=jax.ShapeDtypeStruct((B_pad, H_pad), h_prev.dtype),
        grid_spec=pltpu.PrefetchScalarGridSpec(
            num_scalar_prefetch=0,
            grid=(B_pad // tb,),
            in_specs=[
                pl.BlockSpec((tb, I_pad), lambda i: (i, 0)),        # x batch tile
                pl.BlockSpec((tb, H_pad), lambda i: (i, 0)),        # h batch tile
                _resident_spec((I_pad, 2 * H_pad), lambda i: (0, 0)),  # fused Wx
                _resident_spec((H_pad, 2 * H_pad), lambda i: (0, 0)),  # fused Wh
                _resident_spec((1, 2 * H_pad), lambda i: (0, 0)),      # fused bias
            ],
            out_specs=pl.BlockSpec((tb, H_pad), lambda i: (i, 0)),
        ),
        compiler_params=pltpu.CompilerParams(
            dimension_semantics=("parallel",),
            vmem_limit_bytes=_vmem_limit_bytes(),
        ),
    )(x_p, h_p, prepared["w_x"], prepared["w_h"], prepared["b"])
    return out[:B, :H]


@functools.partial(jax.jit, static_argnames=("batch_tile",))
def mgu_sequence(xs, h0, prepared, *, batch_tile=512):
    """Fused MGU rollout. xs: (T, B, I), h0: (B, H) -> all hidden states (T, B, H).

    Single pallas_call with grid (batch_tiles, T): weights stay VMEM-resident across
    every step, and the hidden state is carried in an f32 VMEM scratch accumulator
    (no per-step kernel launch, weight re-DMA, or h HBM round-trip).
    """
    T, B, _ = xs.shape
    H = h0.shape[1]
    I_pad = prepared["w_x"].shape[0]
    H_pad = prepared["w_h"].shape[0]

    tb, B_pad = _pick_batch_tiling(B, batch_tile)
    xs_p = _pad_to(xs, (T, B_pad, I_pad))
    h0_p = _pad_to(h0, (B_pad, H_pad)).astype(jnp.float32)   # carried state is f32

    out = pl.pallas_call(
        _mgu_seq_kernel,
        out_shape=jax.ShapeDtypeStruct((T, B_pad, H_pad), h0.dtype),
        grid_spec=pltpu.PrefetchScalarGridSpec(
            num_scalar_prefetch=0,
            grid=(B_pad // tb, T),
            in_specs=[
                pl.BlockSpec((1, tb, I_pad), lambda b, t: (t, b, 0)),     # x_t tile
                pl.BlockSpec((tb, H_pad), lambda b, t: (b, 0)),           # h0 tile
                _resident_spec((I_pad, 2 * H_pad), lambda b, t: (0, 0)),  # fused Wx
                _resident_spec((H_pad, 2 * H_pad), lambda b, t: (0, 0)),  # fused Wh
                _resident_spec((1, 2 * H_pad), lambda b, t: (0, 0)),      # fused bias
            ],
            out_specs=pl.BlockSpec((1, tb, H_pad), lambda b, t: (t, b, 0)),
            scratch_shapes=[pltpu.VMEM((tb, H_pad), jnp.float32)],        # h carry
        ),
        compiler_params=pltpu.CompilerParams(
            dimension_semantics=("parallel", "arbitrary"),   # batch || , time carried
            vmem_limit_bytes=_vmem_limit_bytes(),
        ),
    )(xs_p, h0_p, prepared["w_x"], prepared["w_h"], prepared["b"])
    return out[:, :B, :H]


# ---------------------------------------------------------------------------
# Init + pure-JAX references
# ---------------------------------------------------------------------------

def init_params(key, input_size, hidden_size):
    """Deterministic init matching nn.Linear's U(-1/sqrt(fan_in), 1/sqrt(fan_in))."""
    fan_in = input_size + hidden_size
    bound = 1.0 / math.sqrt(fan_in)
    k1, k2, k3, k4 = jax.random.split(key, 4)
    return {
        "W_z": jax.random.uniform(k1, (hidden_size, fan_in), jnp.float32, -bound, bound),
        "b_z": jax.random.uniform(k2, (hidden_size,), jnp.float32, -bound, bound),
        "W_h": jax.random.uniform(k3, (hidden_size, fan_in), jnp.float32, -bound, bound),
        "b_h": jax.random.uniform(k4, (hidden_size,), jnp.float32, -bound, bound),
    }


def mgu_reference(x_t, h_prev, params):
    """Pure-JAX f32 reference mirroring the PyTorch forward."""
    combined = jnp.concatenate([x_t, h_prev], axis=1)
    z_t = jax.nn.sigmoid(combined @ params["W_z"].T + params["b_z"])
    h_tilde = jnp.tanh(combined @ params["W_h"].T + params["b_h"])
    return (1.0 - z_t) * h_prev + z_t * h_tilde


def mgu_sequence_reference(xs, h0, params):
    def step(h, x):
        h_new = mgu_reference(x, h, params)
        return h_new, h_new
    _, hs = jax.lax.scan(step, h0, xs)
    return hs


if __name__ == "__main__":
    key = jax.random.PRNGKey(0)
    batch, input_size, hidden_size, seq_len = 8, 16, 32, 8

    kp, kx, kh, ks = jax.random.split(key, 4)
    params = init_params(kp, input_size, hidden_size)
    x_t = jax.random.normal(kx, (batch, input_size), jnp.float32)
    h_prev = jax.random.normal(kh, (batch, hidden_size), jnp.float32)
    xs = jax.random.normal(ks, (seq_len, batch, input_size), jnp.float32)

    prepared = prepare_params(params, input_size)   # one-time fuse / transpose / pad

    # Single-step (matches the PyTorch module's forward).
    h_t = mgu_cell(x_t, h_prev, prepared)
    jax.block_until_ready(h_t)
    h_ref = mgu_reference(x_t, h_prev, params)
    assert h_t.shape == (batch, hidden_size)
    # bf16 MXU operands with f32 accumulation -> loosened tolerance vs f32 ref.
    assert jnp.allclose(h_t, h_ref, atol=3e-2, rtol=3e-2), "single-step mismatch"

    # Sequence-fused rollout (weights + hidden state stay on-chip across T steps).
    hs = mgu_sequence(xs, h_prev, prepared)
    jax.block_until_ready(hs)
    hs_ref = mgu_sequence_reference(xs, h_prev, params)
    assert hs.shape == (seq_len, batch, hidden_size)
    assert jnp.allclose(hs, hs_ref, atol=5e-2, rtol=5e-2), "sequence mismatch"

    print("KERNEL_OK")
</pallas_src>

<mosaic_0001>
module attributes {stable_mosaic.version = 11 : i64} {
  func.func @_mgu_cell_kernel(%arg0: i32, %arg1: memref<8x128xf32, #tpu.memory_space<vmem>>, %arg2: memref<8x128xf32, #tpu.memory_space<vmem>>, %arg3: memref<128x256xbf16, #tpu.memory_space<vmem>>, %arg4: memref<128x256xbf16, #tpu.memory_space<vmem>>, %arg5: memref<1x256xf32, #tpu.memory_space<vmem>>, %arg6: memref<8x128xf32, #tpu.memory_space<vmem>>) attributes {dimension_semantics = [#tpu.dimension_semantics<parallel>], iteration_bounds = array<i64: 1>, scalar_prefetch = 0 : i64, scratch_operands = 0 : i64, tpu.core_type = #tpu.core_type<tc>, window_params = [{transform_indices = @transform_0, window_bounds = array<i64: 8, 128>}, {transform_indices = @transform_1, window_bounds = array<i64: 8, 128>}, {pipeline_mode = #tpu.pipeline_mode<synchronous>, transform_indices = @transform_2, window_bounds = array<i64: 128, 256>}, {pipeline_mode = #tpu.pipeline_mode<synchronous>, transform_indices = @transform_3, window_bounds = array<i64: 128, 256>}, {pipeline_mode = #tpu.pipeline_mode<synchronous>, transform_indices = @transform_4, window_bounds = array<i64: 1, 256>}, {transform_indices = @transform_5, window_bounds = array<i64: 8, 128>}]} {
    %c0 = arith.constant 0 : index
    %c0_0 = arith.constant 0 : index
    %0 = vector.load %arg2[%c0, %c0_0] : memref<8x128xf32, #tpu.memory_space<vmem>>, vector<8x128xf32>
    %c0_1 = arith.constant 0 : index
    %c0_2 = arith.constant 0 : index
    %1 = vector.load %arg1[%c0_1, %c0_2] : memref<8x128xf32, #tpu.memory_space<vmem>>, vector<8x128xf32>
    %2 = arith.truncf %1 : vector<8x128xf32> to vector<8x128xbf16>
    %c0_3 = arith.constant 0 : index
    %c0_4 = arith.constant 0 : index
    %3 = vector.load %arg3[%c0_3, %c0_4] : memref<128x256xbf16, #tpu.memory_space<vmem>>, vector<128x256xbf16>
    %cst = arith.constant dense<0.000000e+00> : vector<8x256xf32>
    %4 = tpu.matmul %2, %3, %cst {dimension_numbers = #tpu.dot_dimension_numbers<[1], [0], [0], [1], [0, 0, 1, 1], [], []>} : vector<8x128xbf16>, vector<128x256xbf16>, vector<8x256xf32> -> vector<8x256xf32>
    %c0_5 = arith.constant 0 : index
    %c0_6 = arith.constant 0 : index
    %5 = vector.load %arg2[%c0_5, %c0_6] : memref<8x128xf32, #tpu.memory_space<vmem>>, vector<8x128xf32>
    %6 = arith.truncf %5 : vector<8x128xf32> to vector<8x128xbf16>
    %c0_7 = arith.constant 0 : index
    %c0_8 = arith.constant 0 : index
    %7 = vector.load %arg4[%c0_7, %c0_8] : memref<128x256xbf16, #tpu.memory_space<vmem>>, vector<128x256xbf16>
    %cst_9 = arith.constant dense<0.000000e+00> : vector<8x256xf32>
    %8 = tpu.matmul %6, %7, %cst_9 {dimension_numbers = #tpu.dot_dimension_numbers<[1], [0], [0], [1], [0, 0, 1, 1], [], []>} : vector<8x128xbf16>, vector<128x256xbf16>, vector<8x256xf32> -> vector<8x256xf32>
    %9 = arith.addf %4, %8 : vector<8x256xf32>
    %c0_10 = arith.constant 0 : index
    %c0_11 = arith.constant 0 : index
    %10 = vector.load %arg5[%c0_10, %c0_11] : memref<1x256xf32, #tpu.memory_space<vmem>>, vector<1x256xf32>
    %11 = vector.broadcast %10 : vector<1x256xf32> to vector<8x256xf32>
    %12 = arith.addf %9, %11 : vector<8x256xf32>
    %13 = vector.extract_strided_slice %12 {offsets = [0, 0], sizes = [8, 128], strides = [1, 1]} : vector<8x256xf32> to vector<8x128xf32>
    %cst_12 = arith.constant 0.000000e+00 : f32
    %14 = vector.broadcast %cst_12 : f32 to vector<8x128xf32>
    %15 = arith.subf %14, %13 : vector<8x128xf32>
    %16 = math.exp %15 : vector<8x128xf32>
    %cst_13 = arith.constant 1.000000e+00 : f32
    %17 = vector.broadcast %cst_13 : f32 to vector<8x128xf32>
    %18 = arith.addf %17, %16 : vector<8x128xf32>
    %19 = tpu.reciprocal %18 {approx = true} : vector<8x128xf32> -> vector<8x128xf32>
    %20 = vector.extract_strided_slice %12 {offsets = [0, 128], sizes = [8, 128], strides = [1, 1]} : vector<8x256xf32> to vector<8x128xf32>
    %21 = math.tanh %20 : vector<8x128xf32>
    %22 = arith.subf %21, %0 : vector<8x128xf32>
    %23 = arith.mulf %19, %22 : vector<8x128xf32>
    %24 = arith.addf %0, %23 : vector<8x128xf32>
    %c0_14 = arith.constant 0 : index
    %c0_15 = arith.constant 0 : index
    %25 = vector.load %arg6[%c0_14, %c0_15] : memref<8x128xf32, #tpu.memory_space<vmem>>, vector<8x128xf32>
    tpu.vector_store %arg6[%c0_14, %c0_15], %24 {strides = array<i32>} : memref<8x128xf32, #tpu.memory_space<vmem>>, vector<8x128xf32>,
    return
  }
  func.func @transform_0(%arg0: i32) -> (i32, i32) {
    %c0_i32 = arith.constant 0 : i32
    %c0_i32_0 = arith.constant 0 : i32
    return %arg0, %c0_i32 : i32, i32
  }
  func.func @transform_1(%arg0: i32) -> (i32, i32) {
    %c0_i32 = arith.constant 0 : i32
    %c0_i32_0 = arith.constant 0 : i32
    return %arg0, %c0_i32 : i32, i32
  }
  func.func @transform_2(%arg0: i32) -> (i32, i32) {
    %c0_i32 = arith.constant 0 : i32
    %c0_i32_0 = arith.constant 0 : i32
    %c0_i32_1 = arith.constant 0 : i32
    return %c0_i32, %c0_i32_0 : i32, i32
  }
  func.func @transform_3(%arg0: i32) -> (i32, i32) {
    %c0_i32 = arith.constant 0 : i32
    %c0_i32_0 = arith.constant 0 : i32
    %c0_i32_1 = arith.constant 0 : i32
    return %c0_i32, %c0_i32_0 : i32, i32
  }
  func.func @transform_4(%arg0: i32) -> (i32, i32) {
    %c0_i32 = arith.constant 0 : i32
    %c0_i32_0 = arith.constant 0 : i32
    %c0_i32_1 = arith.constant 0 : i32
    return %c0_i32, %c0_i32_0 : i32, i32
  }
  func.func @transform_5(%arg0: i32) -> (i32, i32) {
    %c0_i32 = arith.constant 0 : i32
    %c0_i32_0 = arith.constant 0 : i32
    return %arg0, %c0_i32 : i32, i32
  }
}

</mosaic_0001>

<llo_original>
// kernel: mgu_cell.1
$region0: #{mgu_cell.1}
  #allocation0 [shape = 'u32[]', space=smem, size = 0x4, offset = 0x4, fixed_abs, tag = 'smem constant byte address 0x4 - core index']
  #allocation1 [shape = 'u32[72,128]{1,0:T(1,128)}', space=vmem, size = 0x9000, scoped, tag = 'internal scratch']
  %s0 = inlined_call_operand.vmem [shape: f32[8,128], index: 0, kind: input, shape index: {}]
  %s1 = inlined_call_operand.vmem [shape: f32[8,128], index: 1, kind: input, shape index: {}]
  %s2 = inlined_call_operand.hbm [shape: bf16[128,256], index: 2, kind: input, shape index: {}]
  %s3 = inlined_call_operand.hbm [shape: bf16[128,256], index: 3, kind: input, shape index: {}]
  %s4 = inlined_call_operand.vmem [shape: f32[1,256], index: 4, kind: input, shape index: {}]
  %s5 = inlined_call_operand.hbm [shape: f32[8,128], index: 5, kind: output, shape index: {}]
  %s6 = sld [smem:[#allocation0]]
  $region38: #{mgu_cell.1} parent=0
    _
  %s8 = ssub.s32 1, %s6
  %s9 = scalar_select 0, %s8, %s6
  $region1: #{mgu_cell.1} parent=0
    #allocation2 [shape = 'u8[65536]{0}', space=vmem, size = 0x10000, scoped, tag = 'input window, operand 2, single buffered']
    #allocation3 [shape = 's32[1]{0}', space=sflag, size = 0x4, scoped, tag = 'scoped memory for mgu_cell.1']
    #allocation4 [shape = 's32[1]{0}', space=sflag, size = 0x4, scoped, tag = 'scoped memory for mgu_cell.1']
    #allocation5 [shape = 'u8[65536]{0}', space=vmem, size = 0x10000, scoped, tag = 'input window, operand 3, single buffered']
    #allocation6 [shape = 's32[1]{0}', space=sflag, size = 0x4, scoped, tag = 'scoped memory for mgu_cell.1']
    #allocation7 [shape = 'u8[4096]{0}', space=vmem, size = 0x1000, scoped, tag = 'output window, operand 0, single buffered']
    %10 = vsyncpa [#allocation3], 0
    %11 = vsyncpa [#allocation6], 0
    %12 = vsyncpa [#allocation4], 0
    // Predicated region
    $region2: #{mgu_cell.1} parent=1 // pred_check
      _
    $region3: #{mgu_cell.1} parent=1 // pred_check_branch
      %14 = sbr.rel (0) target = $region5
    $region4: #{mgu_cell.1} parent=1 // pred_region
      _
    $region5: #{mgu_cell.1} parent=1 // pred_fallthru
      _
    // Predicated region
    $region6: #{mgu_cell.1} parent=1 // pred_check
      _
    $region7: #{mgu_cell.1} parent=1 // pred_check_branch
      %16 = sbr.rel (0) target = $region9
    $region8: #{mgu_cell.1} parent=1 // pred_region
      _
    $region9: #{mgu_cell.1} parent=1 // pred_fallthru
      _
    // Predicated region
    $region10: #{mgu_cell.1} parent=1 // pred_check
      _
    $region11: #{mgu_cell.1} parent=1 // pred_check_branch
      %18 = sbr.rel (0) target = $region13
    $region12: #{mgu_cell.1} parent=1 // pred_region
      %20 = vsyncadd [#allocation3], 0
      %s21 = sshll.u32 %s2, 4
      %s22 = int_to_ptr.hbm [resolvable:$true] %s21
      %s23 = sshll.u32 [#allocation2], 4
      %s24 = int_to_ptr.vmem [resolvable:$true] %s23
      %29 = dma.hbm_to_vmem [thread:$0]  %s22, 2048, %s24, [#allocation3], 128, 128, 8
    $region13: #{mgu_cell.1} parent=1 // pred_fallthru
      _
    // Predicated region
    $region14: #{mgu_cell.1} parent=1 // pred_check
      _
    $region15: #{mgu_cell.1} parent=1 // pred_check_branch
      %31 = sbr.rel (0) target = $region17
    $region16: #{mgu_cell.1} parent=1 // pred_region
      %33 = vsyncadd [#allocation6], 0
      %s34 = sshll.u32 %s3, 4
      %s35 = int_to_ptr.hbm [resolvable:$true] %s34
      %s36 = sshll.u32 [#allocation5], 4
      %s37 = int_to_ptr.vmem [resolvable:$true] %s36
      %42 = dma.hbm_to_vmem [thread:$0]  %s35, 2048, %s37, [#allocation6], 128, 128, 8
    $region17: #{mgu_cell.1} parent=1 // pred_fallthru
      _
    // Predicated region
    $region18: #{mgu_cell.1} parent=1 // pred_check
      _
    $region19: #{mgu_cell.1} parent=1 // pred_check_branch
      %44 = sbr.rel (0) target = $region21
    $region20: #{mgu_cell.1} parent=1 // pred_region
      _
    $region21: #{mgu_cell.1} parent=1 // pred_fallthru
      _
    // Predicated region
    $region22: #{mgu_cell.1} parent=1 // pred_check
      _
    $region23: #{mgu_cell.1} parent=1 // pred_check_branch
      %46 = sbr.rel (0) target = $region25
    $region24: #{mgu_cell.1} parent=1 // pred_region
      %48 = dma.done [#allocation3], 2048
    $region25: #{mgu_cell.1} parent=1 // pred_fallthru
      _
    // Predicated region
    $region26: #{mgu_cell.1} parent=1 // pred_check
      _
    $region27: #{mgu_cell.1} parent=1 // pred_check_branch
      %50 = sbr.rel (0) target = $region29
    $region28: #{mgu_cell.1} parent=1 // pred_region
      %52 = dma.done [#allocation6], 2048
    $region29: #{mgu_cell.1} parent=1 // pred_fallthru
      _
    %v53 = vld [vmem:[%s1] sm:$0xff]
    %v54 = vld [vmem:[%s0] sm:$0xff]
    %v55 = vpack.c.bf16 %v54, %v54
    %v56 = vld [vmem:[#allocation2] sm:$0xff]
    %v57 = vld [vmem:[#allocation2 + $0x8] sm:$0xff]
    %v58 = vld [vmem:[#allocation2 + $0x10] sm:$0xff]
    %v59 = vld [vmem:[#allocation2 + $0x18] sm:$0xff]
    %v60 = vld [vmem:[#allocation2 + $0x20] sm:$0xff]
    %v61 = vld [vmem:[#allocation2 + $0x28] sm:$0xff]
    %v62 = vld [vmem:[#allocation2 + $0x30] sm:$0xff]
    %v63 = vld [vmem:[#allocation2 + $0x38] sm:$0xff]
    %v64 = vld [vmem:[#allocation2 + $0x40] sm:$0xff]
    %v65 = vld [vmem:[#allocation2 + $0x48] sm:$0xff]
    %v66 = vld [vmem:[#allocation2 + $0x50] sm:$0xff]
    %v67 = vld [vmem:[#allocation2 + $0x58] sm:$0xff]
    %v68 = vld [vmem:[#allocation2 + $0x60] sm:$0xff]
    %v69 = vld [vmem:[#allocation2 + $0x68] sm:$0xff]
    %v70 = vld [vmem:[#allocation2 + $0x70] sm:$0xff]
    %v71 = vld [vmem:[#allocation2 + $0x78] sm:$0xff]
    %v72 = vpack.c.bf16 %v53, %v53
    %v73 = vld [vmem:[#allocation5] sm:$0xff]
    %v74 = vld [vmem:[#allocation5 + $0x8] sm:$0xff]
    %v75 = vld [vmem:[#allocation5 + $0x10] sm:$0xff]
    %v76 = vld [vmem:[#allocation5 + $0x18] sm:$0xff]
    %v77 = vld [vmem:[#allocation5 + $0x20] sm:$0xff]
    %v78 = vld [vmem:[#allocation5 + $0x28] sm:$0xff]
    %v79 = vld [vmem:[#allocation5 + $0x30] sm:$0xff]
    %v80 = vld [vmem:[#allocation5 + $0x38] sm:$0xff]
    %v81 = vld [vmem:[#allocation5 + $0x40] sm:$0xff]
    %v82 = vld [vmem:[#allocation5 + $0x48] sm:$0xff]
    %v83 = vld [vmem:[#allocation5 + $0x50] sm:$0xff]
    %v84 = vld [vmem:[#allocation5 + $0x58] sm:$0xff]
    %v85 = vld [vmem:[#allocation5 + $0x60] sm:$0xff]
    %v86 = vld [vmem:[#allocation5 + $0x68] sm:$0xff]
    %v87 = vld [vmem:[#allocation5 + $0x70] sm:$0xff]
    %v88 = vld [vmem:[#allocation5 + $0x78] sm:$0xff]
    %v105 = vunpack.c.l.b16 %v73
    %v106 = vunpack.c.h.b16 %v73
    %v107 = vunpack.c.l.b16 %v74
    %v108 = vunpack.c.h.b16 %v74
    %v109 = vunpack.c.l.b16 %v75
    %v110 = vunpack.c.h.b16 %v75
    %v111 = vunpack.c.l.b16 %v76
    %v112 = vunpack.c.h.b16 %v76
    %v113 = vunpack.c.l.b16 %v77
    %v114 = vunpack.c.h.b16 %v77
    %v115 = vunpack.c.l.b16 %v78
    %v116 = vunpack.c.h.b16 %v78
    %v117 = vunpack.c.l.b16 %v79
    %v118 = vunpack.c.h.b16 %v79
    %v119 = vunpack.c.l.b16 %v80
    %v120 = vunpack.c.h.b16 %v80
    %v121 = vunpack.c.l.b16 %v81
    %v122 = vunpack.c.h.b16 %v81
    %v123 = vunpack.c.l.b16 %v82
    %v124 = vunpack.c.h.b16 %v82
    %v125 = vunpack.c.l.b16 %v83
    %v126 = vunpack.c.h.b16 %v83
    %v127 = vunpack.c.l.b16 %v84
    %v128 = vunpack.c.h.b16 %v84
    %v129 = vunpack.c.l.b16 %v85
    %v130 = vunpack.c.h.b16 %v85
    %v131 = vunpack.c.l.b16 %v86
    %v132 = vunpack.c.h.b16 %v86
    %v133 = vunpack.c.l.b16 %v87
    %v134 = vunpack.c.h.b16 %v87
    %v135 = vunpack.c.l.b16 %v88
    %v136 = vunpack.c.h.b16 %v88
    %v137 = vpack.c.b16 %v107, %v105
    %v138 = vpack.c.b16 %v108, %v106
    %v139 = vpack.c.b16 %v111, %v109
    %v140 = vpack.c.b16 %v112, %v110
    %v141 = vpack.c.b16 %v115, %v113
    %v142 = vpack.c.b16 %v116, %v114
    %v143 = vpack.c.b16 %v119, %v117
    %v144 = vpack.c.b16 %v120, %v118
    %v145 = vpack.c.b16 %v123, %v121
    %v146 = vpack.c.b16 %v124, %v122
    %v147 = vpack.c.b16 %v127, %v125
    %v148 = vpack.c.b16 %v128, %v126
    %v149 = vpack.c.b16 %v131, %v129
    %v150 = vpack.c.b16 %v132, %v130
    %v151 = vpack.c.b16 %v135, %v133
    %v152 = vpack.c.b16 %v136, %v134
    %169 = vmatpush.bf16.msra.mxu0 %v151
    %170 = vmatpush.bf16.msra.mxu0 %v149
    %171 = vmatpush.bf16.msra.mxu0 %v147
    %172 = vmatpush.bf16.msra.mxu0 %v145
    %173 = vmatpush.bf16.msra.mxu0 %v143
    %174 = vmatpush.bf16.msra.mxu0 %v141
    %175 = vmatpush.bf16.msra.mxu0 %v139
    %176 = vmatpush.bf16.msra.mxu0 %v137
    %177 = vmatmul.bf16.gmra.mxu0 %v72
    %v178 = vpop.f32.mrf.mxu0
    %v179 = vadd.f32 0.0, %v178
    %v180 = vpop.f32.mrf.mxu0
    %181 = vdwg.mxu0
    %182 = vmatpush.bf16.msra.mxu0 %v152
    %183 = vmatpush.bf16.msra.mxu0 %v150
    %184 = vmatpush.bf16.msra.mxu0 %v148
    %185 = vmatpush.bf16.msra.mxu0 %v146
    %186 = vmatpush.bf16.msra.mxu0 %v144
    %187 = vmatpush.bf16.msra.mxu0 %v142
    %188 = vmatpush.bf16.msra.mxu0 %v140
    %189 = vmatpush.bf16.msra.mxu0 %v138
    %190 = vmatmul.bf16.gmra.mxu0 %v72
    %v191 = vpop.f32.mrf.mxu0
    %v192 = vadd.f32 0.0, %v191
    %v193 = vpop.f32.mrf.mxu0
    %194 = vdwg.mxu0
    %v211 = vunpack.c.l.b16 %v56
    %v212 = vunpack.c.h.b16 %v56
    %v213 = vunpack.c.l.b16 %v57
    %v214 = vunpack.c.h.b16 %v57
    %v215 = vunpack.c.l.b16 %v58
    %v216 = vunpack.c.h.b16 %v58
    %v217 = vunpack.c.l.b16 %v59
    %v218 = vunpack.c.h.b16 %v59
    %v219 = vunpack.c.l.b16 %v60
    %v220 = vunpack.c.h.b16 %v60
    %v221 = vunpack.c.l.b16 %v61
    %v222 = vunpack.c.h.b16 %v61
    %v223 = vunpack.c.l.b16 %v62
    %v224 = vunpack.c.h.b16 %v62
    %v225 = vunpack.c.l.b16 %v63
    %v226 = vunpack.c.h.b16 %v63
    %v227 = vunpack.c.l.b16 %v64
    %v228 = vunpack.c.h.b16 %v64
    %v229 = vunpack.c.l.b16 %v65
    %v230 = vunpack.c.h.b16 %v65
    %v231 = vunpack.c.l.b16 %v66
    %v232 = vunpack.c.h.b16 %v66
    %v233 = vunpack.c.l.b16 %v67
    %v234 = vunpack.c.h.b16 %v67
    %v235 = vunpack.c.l.b16 %v68
    %v236 = vunpack.c.h.b16 %v68
    %v237 = vunpack.c.l.b16 %v69
    %v238 = vunpack.c.h.b16 %v69
    %v239 = vunpack.c.l.b16 %v70
    %v240 = vunpack.c.h.b16 %v70
    %v241 = vunpack.c.l.b16 %v71
    %v242 = vunpack.c.h.b16 %v71
    %v243 = vpack.c.b16 %v213, %v211
    %v244 = vpack.c.b16 %v214, %v212
    %v245 = vpack.c.b16 %v217, %v215
    %v246 = vpack.c.b16 %v218, %v216
    %v247 = vpack.c.b16 %v221, %v219
    %v248 = vpack.c.b16 %v222, %v220
    %v249 = vpack.c.b16 %v225, %v223
    %v250 = vpack.c.b16 %v226, %v224
    %v251 = vpack.c.b16 %v229, %v227
    %v252 = vpack.c.b16 %v230, %v228
    %v253 = vpack.c.b16 %v233, %v231
    %v254 = vpack.c.b16 %v234, %v232
    %v255 = vpack.c.b16 %v237, %v235
    %v256 = vpack.c.b16 %v238, %v236
    %v257 = vpack.c.b16 %v241, %v239
    %v258 = vpack.c.b16 %v242, %v240
    %275 = vmatpush.bf16.msra.mxu0 %v257
    %276 = vmatpush.bf16.msra.mxu0 %v255
    %277 = vmatpush.bf16.msra.mxu0 %v253
    %278 = vmatpush.bf16.msra.mxu0 %v251
    %279 = vmatpush.bf16.msra.mxu0 %v249
    %280 = vmatpush.bf16.msra.mxu0 %v247
    %281 = vmatpush.bf16.msra.mxu0 %v245
    %282 = vmatpush.bf16.msra.mxu0 %v243
    %283 = vmatmul.bf16.gmra.mxu0 %v55
    %v284 = vpop.f32.mrf.mxu0
    %v285 = vadd.f32 %v179, %v284
    %v286 = vpop.f32.mrf.mxu0
    %287 = vdwg.mxu0
    %288 = vmatpush.bf16.msra.mxu0 %v258
    %289 = vmatpush.bf16.msra.mxu0 %v256
    %290 = vmatpush.bf16.msra.mxu0 %v254
    %291 = vmatpush.bf16.msra.mxu0 %v252
    %292 = vmatpush.bf16.msra.mxu0 %v250
    %293 = vmatpush.bf16.msra.mxu0 %v248
    %294 = vmatpush.bf16.msra.mxu0 %v246
    %295 = vmatpush.bf16.msra.mxu0 %v244
    %296 = vmatmul.bf16.gmra.mxu0 %v55
    %v297 = vpop.f32.mrf.mxu0
    %v298 = vadd.f32 %v192, %v297
    %v299 = vpop.f32.mrf.mxu0
    %300 = vdwg.mxu0
    %v301 = vld [vmem:[%s4] sm:$0x3]
    %v303 = vperm.slane %v301, 0
    %v304 = vperm.slane %v301, 1
    %v307 = vadd.f32 %v285, %v303
    %v308 = vadd.f32 %v298, %v304
    %v309 = vsub.f32 0.0, %v307
    %v310 = vmul.f32 %v309, 1.442695
    %v311 = vpow.pop %v310
    %v312 = vadd.f32 %v311, 1.0
    %v313 = vrcp.pop %v312
    %v314 = vtanh.pop %v308
    %v315 = vsub.f32 %v314, %v53
    %v316 = vmul.f32 %v313, %v315
    %v317 = vadd.f32 %v53, %v316
    %318 = vst [vmem:[#allocation7] sm:$0xff] %v317
    // Predicated region
    $region30: #{mgu_cell.1} parent=1 // pred_check
      _
    $region31: #{mgu_cell.1} parent=1 // pred_check_branch
      %320 = sbr.rel (0) target = $region33
    $region32: #{mgu_cell.1} parent=1 // pred_region
      %322 = vsyncadd [#allocation4], 0
      %s324 = sshll.u32 [#allocation7], 4
      %s325 = int_to_ptr.vmem [resolvable:$true] %s324
      %s326 = sshll.u32 %s5, 4
      %s327 = int_to_ptr.hbm [resolvable:$true] %s326
      %329 = dma.vmem_to_hbm [thread:$0]  %s325, 128, %s327, [#allocation4]
    $region33: #{mgu_cell.1} parent=1 // pred_fallthru
      _
    // Predicated region
    $region34: #{mgu_cell.1} parent=1 // pred_check
      _
    $region35: #{mgu_cell.1} parent=1 // pred_check_branch
      %331 = sbr.rel (0) target = $region37
    $region36: #{mgu_cell.1} parent=1 // pred_region
      %333 = dma.done [#allocation4], 128
    $region37: #{mgu_cell.1} parent=1 // pred_fallthru
      _
    %334 = vsyncpa [#allocation3], 1
    %335 = vsyncpa [#allocation6], 1
    %336 = vsyncpa [#allocation4], 1

</llo_original>
